<compile_context>
chip_gen: v7x
topology: tpu7x:2x2x1
jax: 0.10.0
libtpu: 0.0.40
codegen_flags: <defaults>
</compile_context>

<pallas_src>
import jax
import jax.numpy as jnp
from jax.experimental import pallas as pl
from jax.experimental.pallas import tpu as pltpu


# ~1-2 MiB of traffic per grid step reaches ~85% of HBM roofline (measured on
# v6e) while keeping the grid long enough for pipelining / megacore sharding.
_PER_STEP_BYTES_TARGET = 2 * 1024 * 1024
_MIN_BLOCK_BATCH = 256        # floor: amortize the ~0.35us per-grid-step overhead
_MAX_BLOCK_BATCH = 1024
_MIN_GRID_STEPS = 8           # aim for >=8 steps: pipelining + v7x 2-TC sharding
# Switch to feature-axis tiling only when even the minimum-row full-row block
# would be this large (keeps double-buffered tiles far from the 32 MiB scoped /
# 64 MiB physical VMEM limit on v7x).
_FEATURE_TILE_THRESHOLD_BYTES = 8 * 1024 * 1024
_VMEM_LIMIT_BYTES = 32 * 1024 * 1024


def _cdiv(a: int, b: int) -> int:
    return -(-a // b)


def _round_up(a: int, b: int) -> int:
    return _cdiv(a, b) * b


def _sublane_align(itemsize: int) -> int:
    # sub-32-bit dtypes pack along sublanes: f32 -> 8, bf16/f16 -> 16, int8/fp8 -> 32
    return 8 * max(1, 4 // itemsize)


def _pick_block_batch(batch: int, row_bytes: int, itemsize: int) -> int:
    """Batch tile: ~_PER_STEP_BYTES_TARGET per step, floor 256 rows, >= ~8 steps."""
    align = _sublane_align(itemsize)
    rows_budget = _PER_STEP_BYTES_TARGET // max(1, row_bytes)
    rows_steps = _round_up(_cdiv(batch, _MIN_GRID_STEPS), align)
    tb = min(rows_budget, rows_steps, _MAX_BLOCK_BATCH)
    tb = max(tb, _MIN_BLOCK_BATCH)                 # per-step overhead floor
    tb = max(align, (tb // align) * align)         # sublane / packing alignment
    if tb >= batch:
        return batch                               # tiny batch: single full block
    return tb


def _or_gate_kernel_rows(x_ref, o_ref):
    """Fused path: one contiguous full-row block (tb, in_features) per step."""
    g = o_ref.shape[-1]
    # Keep logical_or(a>0, b>0) (NaN-exact vs. PyTorch gt/logical_or); the extra
    # VALU op is hidden slack in this HBM-bound kernel.
    fired = jnp.logical_or(x_ref[:, :g] > 0, x_ref[:, g:] > 0)
    one = jnp.ones((), dtype=o_ref.dtype)
    o_ref[...] = jnp.where(fired, one, -one)


def _or_gate_kernel_cols(a_ref, b_ref, o_ref):
    """Column-tiled path: matching (tb, tg) slabs of the two halves."""
    fired = jnp.logical_or(a_ref[...] > 0, b_ref[...] > 0)
    one = jnp.ones((), dtype=o_ref.dtype)
    o_ref[...] = jnp.where(fired, one, -one)


def or_gate_forward(x: jax.Array, alpha: jax.Array, *,
                    block_batch: int | None = None,
                    feature_block: int | None = None) -> jax.Array:
    """Pallas implementation of OR_Gate.forward.

    x:     [batch, in_features], in_features even.
    alpha: [1] non-trainable parameter (backward-only scaling factor, unused here).
    block_batch / feature_block: optional tiling overrides (mostly for tests).
    """
    if x.ndim != 2:
        raise ValueError(
            "Gates layers only accept rank-2 tensors [batch, gate_count * 2].")
    if x.shape[-1] % 2 != 0:
        raise ValueError("in_features must be even.")
    del alpha  # forward pass does not use alpha

    batch, in_features = x.shape
    gate_count = in_features // 2
    itemsize = jnp.dtype(x.dtype).itemsize
    align = _sublane_align(itemsize)
    row_bytes = (in_features + gate_count) * itemsize   # read + write per row

    out_shape = jax.ShapeDtypeStruct((batch, gate_count), x.dtype)
    cost = pl.CostEstimate(
        flops=3 * batch * gate_count,                   # 2 compares + 1 select
        transcendentals=0,
        bytes_accessed=batch * row_bytes,
    )

    # Decide whether to tile the feature axis (only for extremely wide rows,
    # or when explicitly forced). Full-row contiguous DMA is preferred.
    tg = feature_block
    if tg is None:
        minimal_block_bytes = min(batch, align) * row_bytes
        if minimal_block_bytes > _FEATURE_TILE_THRESHOLD_BYTES and gate_count % 128 == 0:
            for cand in (1024, 512, 256, 128):
                if gate_count % cand == 0:
                    tg = cand
                    break
        # TODO(synk): if gate_count % 128 != 0 AND rows are extremely wide we
        # still fall back to the full-row path (raised VMEM usage); such shapes
        # are not expected from this module.

    if tg is not None:
        # ---- 2-D grid: (batch tiles, gate column tiles) -------------------
        if tg % 128 != 0 or gate_count % tg != 0:
            raise ValueError("feature_block must be a multiple of 128 that divides gate_count.")
        tb = block_batch if block_batch is not None else _pick_block_batch(
            batch, 3 * tg * itemsize, itemsize)
        n_gb = gate_count // tg
        grid = (pl.cdiv(batch, tb), n_gb)
        in_specs = [
            pl.BlockSpec((tb, tg), lambda i, j: (i, j)),                 # first half slab
            pl.BlockSpec((tb, tg), lambda i, j, n=n_gb: (i, j + n)),     # second half slab
        ]
        out_specs = pl.BlockSpec((tb, tg), lambda i, j: (i, j))
        return pl.pallas_call(
            _or_gate_kernel_cols,
            out_shape=out_shape,
            grid=grid,
            in_specs=in_specs,
            out_specs=out_specs,
            compiler_params=pltpu.CompilerParams(
                dimension_semantics=("parallel", "parallel"),
                vmem_limit_bytes=_VMEM_LIMIT_BYTES,
            ),
            cost_estimate=cost,
        )(x, x)

    # ---- 1-D grid over batch, one contiguous full-row block per step ------
    tb = block_batch if block_batch is not None else _pick_block_batch(
        batch, row_bytes, itemsize)
    grid = (pl.cdiv(batch, tb),)
    in_specs = [pl.BlockSpec((tb, in_features), lambda i: (i, 0))]
    out_specs = pl.BlockSpec((tb, gate_count), lambda i: (i, 0))
    return pl.pallas_call(
        _or_gate_kernel_rows,
        out_shape=out_shape,
        grid=grid,
        in_specs=in_specs,
        out_specs=out_specs,
        compiler_params=pltpu.CompilerParams(
            dimension_semantics=("parallel",),     # shards batch axis on v7x's 2 TCs
            vmem_limit_bytes=_VMEM_LIMIT_BYTES,
        ),
        cost_estimate=cost,
    )(x)


def or_gate_reference(x: jax.Array) -> jax.Array:
    gate_count = x.shape[-1] // 2
    fired = jnp.logical_or(x[:, :gate_count] > 0.0, x[:, gate_count:] > 0.0)
    return (fired.astype(jnp.float32) * 2.0 - 1.0).astype(x.dtype)


if __name__ == "__main__":
    key = jax.random.PRNGKey(0)

    # Deterministic parameter init, matching torch.nn.Parameter(torch.tensor([alpha]))
    alpha = jnp.array([0.5], dtype=jnp.float32)

    # Exercise every code path at small shapes:
    #   (8, 64)    gate_count=32  : sub-128-lane fused path (masked stores)
    #   (8, 256)   gate_count=128 : lane-aligned fused path, single step
    #   (300, 256) gate_count=128 : multi-step batch grid + ragged last tile
    #   (16, 512)  gate_count=256 : forced 2-D column-tiled path (robustness fallback)
    cases = [
        ((8, 64), jnp.float32, {}),
        ((8, 256), jnp.float32, {}),
        ((300, 256), jnp.float32, {}),
        ((16, 512), jnp.float32, dict(block_batch=8, feature_block=128)),
        ((48, 256), jnp.bfloat16, {}),   # sublane-packing / narrow-dtype check
    ]
    for (batch, in_features), dtype, kwargs in cases:
        key, sub = jax.random.split(key)
        x = jax.random.normal(sub, (batch, in_features), dtype=dtype)

        out = jax.block_until_ready(or_gate_forward(x, alpha, **kwargs))
        ref = or_gate_reference(x)

        assert out.shape == (batch, in_features // 2)
        assert out.dtype == x.dtype
        assert bool(jnp.all(out == ref))

    print("KERNEL_OK")
</pallas_src>

<mosaic_0001>
module attributes {stable_mosaic.version = 11 : i64} {
  func.func @_or_gate_kernel_rows(%arg0: i32, %arg1: memref<8x64xf32, #tpu.memory_space<vmem>>, %arg2: memref<8x32xf32, #tpu.memory_space<vmem>>) attributes {dimension_semantics = [#tpu.dimension_semantics<parallel>], iteration_bounds = array<i64: 1>, scalar_prefetch = 0 : i64, scratch_operands = 0 : i64, tpu.core_type = #tpu.core_type<tc>, window_params = [{transform_indices = @transform_0, window_bounds = array<i64: 8, 64>}, {transform_indices = @transform_1, window_bounds = array<i64: 8, 32>}]} {
    %c0 = arith.constant 0 : index
    %c0_0 = arith.constant 0 : index
    %0 = vector.load %arg1[%c0, %c0_0] : memref<8x64xf32, #tpu.memory_space<vmem>>, vector<8x32xf32>
    %cst = arith.constant 0.000000e+00 : f32
    %1 = vector.broadcast %cst : f32 to vector<8x32xf32>
    %2 = arith.cmpf ogt, %0, %1 : vector<8x32xf32>
    %c0_1 = arith.constant 0 : index
    %c32 = arith.constant 32 : index
    %3 = vector.load %arg1[%c0_1, %c32] : memref<8x64xf32, #tpu.memory_space<vmem>>, vector<8x32xf32>
    %cst_2 = arith.constant 0.000000e+00 : f32
    %4 = vector.broadcast %cst_2 : f32 to vector<8x32xf32>
    %5 = arith.cmpf ogt, %3, %4 : vector<8x32xf32>
    %6 = arith.ori %2, %5 : vector<8x32xi1>
    %cst_3 = arith.constant 0.000000e+00 : f32
    %cst_4 = arith.constant 1.000000e+00 : f32
    %7 = arith.subf %cst_3, %cst_4 : f32
    %cst_5 = arith.constant 1.000000e+00 : f32
    %8 = vector.broadcast %cst_5 : f32 to vector<8x32xf32>
    %9 = vector.broadcast %7 : f32 to vector<8x32xf32>
    %10 = arith.select %6, %8, %9 : vector<8x32xi1>, vector<8x32xf32>
    %c0_6 = arith.constant 0 : index
    %c0_7 = arith.constant 0 : index
    %11 = vector.load %arg2[%c0_6, %c0_7] : memref<8x32xf32, #tpu.memory_space<vmem>>, vector<8x32xf32>
    tpu.vector_store %arg2[%c0_6, %c0_7], %10 {strides = array<i32>} : memref<8x32xf32, #tpu.memory_space<vmem>>, vector<8x32xf32>,
    return
  }
  func.func @transform_0(%arg0: i32) -> (i32, i32) {
    %c0_i32 = arith.constant 0 : i32
    %c0_i32_0 = arith.constant 0 : i32
    return %arg0, %c0_i32 : i32, i32
  }
  func.func @transform_1(%arg0: i32) -> (i32, i32) {
    %c0_i32 = arith.constant 0 : i32
    %c0_i32_0 = arith.constant 0 : i32
    return %arg0, %c0_i32 : i32, i32
  }
}

</mosaic_0001>

<llo_original>
// kernel: tpu_custom_call.1
$region0: #{tpu_custom_call.1}
  #allocation0 [shape = 'u32[]', space=smem, size = 0x4, offset = 0x4, fixed_abs, tag = 'smem constant byte address 0x4 - core index']
  #allocation1 [shape = 'u32[144,128]{1,0:T(1,128)}', space=vmem, size = 0x12000, scoped, tag = 'internal scratch']
  %s0 = inlined_call_operand.hbm [shape: f32[8,64], index: 0, kind: input, shape index: {}]
  %s1 = inlined_call_operand.hbm [shape: f32[8,32], index: 1, kind: output, shape index: {}]
  %s2 = sld [smem:[#allocation0]]
  $region18: #{tpu_custom_call.1} parent=0
    _
  %s4 = ssub.s32 1, %s2
  %s5 = scalar_select 0, %s4, %s2
  $region1: #{tpu_custom_call.1} parent=0
    #allocation2 [shape = 'u8[4096]{0}', space=vmem, size = 0x1000, scoped, tag = 'input window, operand 0, single buffered']
    #allocation3 [shape = 's32[1]{0}', space=sflag, size = 0x4, scoped, tag = 'scoped memory for tpu_custom_call.1']
    #allocation4 [shape = 's32[1]{0}', space=sflag, size = 0x4, scoped, tag = 'scoped memory for tpu_custom_call.1']
    #allocation5 [shape = 'u8[4096]{0}', space=vmem, size = 0x1000, scoped, tag = 'output window, operand 0, single buffered']
    %6 = vsyncpa [#allocation3], 0
    %7 = vsyncpa [#allocation4], 0
    // Predicated region
    $region2: #{tpu_custom_call.1} parent=1 // pred_check
      _
    $region3: #{tpu_custom_call.1} parent=1 // pred_check_branch
      %9 = sbr.rel (0) target = $region5
    $region4: #{tpu_custom_call.1} parent=1 // pred_region
      %s11 = ssub.s32 128, 128
      %12 = vsyncadd [#allocation3], %s11
      %s14 = sshll.u32 [#allocation2], 4
      %s15 = int_to_ptr.vmem [resolvable:$true] %s14
      %17 = dma.hbm_to_vmem [thread:$0]  %s0, 128, %s15, [#allocation3]
    $region5: #{tpu_custom_call.1} parent=1 // pred_fallthru
      _
    // Predicated region
    $region6: #{tpu_custom_call.1} parent=1 // pred_check
      _
    $region7: #{tpu_custom_call.1} parent=1 // pred_check_branch
      %19 = sbr.rel (0) target = $region9
    $region8: #{tpu_custom_call.1} parent=1 // pred_region
      %20 = dma.done [#allocation3], 128
    $region9: #{tpu_custom_call.1} parent=1 // pred_fallthru
      _
    %v21 = vld [vmem:[#allocation2] sm:$0xff]
    %vm22 = vcmp.gt.f32.partialorder %v21, 0.0
    %v23 = vsel %vm22, 1, 0
    %24 = vrot.lane.b32.xlu0 %v23, 96
    %v25 = vpop.permute.xlu0 %24
    %vm26 = vcmp.ne.s32.totalorder %v25, 0
    %vm27 = vmor %vm22, %vm26
    %v28 = vsel %vm27, 1.0, -1.0
    %vm29 = vcmask 261120
    %30 = vst.msk [vmem:[#allocation5] sm:$0xff] %vm29, %v28
    // Predicated region
    $region10: #{tpu_custom_call.1} parent=1 // pred_check
      _
    $region11: #{tpu_custom_call.1} parent=1 // pred_check_branch
      %32 = sbr.rel (0) target = $region13
    $region12: #{tpu_custom_call.1} parent=1 // pred_region
      %s34 = ssub.s32 128, 128
      %35 = vsyncadd [#allocation4], %s34
      %s37 = sshll.u32 [#allocation5], 4
      %s38 = int_to_ptr.vmem [resolvable:$true] %s37
      %40 = dma.vmem_to_hbm [thread:$0]  %s38, 128, %s1, [#allocation4]
    $region13: #{tpu_custom_call.1} parent=1 // pred_fallthru
      _
    // Predicated region
    $region14: #{tpu_custom_call.1} parent=1 // pred_check
      _
    $region15: #{tpu_custom_call.1} parent=1 // pred_check_branch
      %42 = sbr.rel (0) target = $region17
    $region16: #{tpu_custom_call.1} parent=1 // pred_region
      %43 = dma.done [#allocation4], 128
    $region17: #{tpu_custom_call.1} parent=1 // pred_fallthru
      _
    %44 = vsyncpa [#allocation3], 1
    %45 = vsyncpa [#allocation4], 1

</llo_original>
